<compile_context>
chip_gen: v6e
topology: v6e:2x2x1
jax: 0.10.0
libtpu: 0.0.40
codegen_flags: <defaults>
</compile_context>

<pallas_src>
import math

import jax
import jax.numpy as jnp
from jax.experimental import pallas as pl
from jax.experimental.pallas import tpu as pltpu


def _round_up(x, m):
    return (x + m - 1) // m * m


def _gcn_kernel(adj_ref, xcat_ref, out_ref, acc_ref):
    # adj_ref  : (tm, tk)       bf16 adjacency tile
    # xcat_ref : (tk, fcat_p)   bf16 [x | x @ weight] tile (lane-padded to 128)
    # out_ref  : (tm, fcat_p)   f32 output slab tile (same block across k)
    # acc_ref  : (tm, fcat_p)   f32 VMEM accumulator
    k = pl.program_id(1)

    @pl.when(k == 0)
    def _():
        acc_ref[...] = jnp.zeros_like(acc_ref)

    acc_ref[...] += jnp.dot(adj_ref[...], xcat_ref[...],
                            preferred_element_type=jnp.float32)

    @pl.when(k == pl.num_programs(1) - 1)
    def _():
        out_ref[...] = acc_ref[...].astype(out_ref.dtype)


def graph_convolution(x, adj, weight, *, tm=128, tk=512,
                      compute_dtype=jnp.bfloat16):
    """Returns (m, m0) matching GraphConvolution.forward."""
    N, fin = x.shape
    fout = weight.shape[1]
    assert adj.shape == (N, N)
    out_dtype = x.dtype

    # Fused RHS: [x | x @ weight].  x @ weight is a tiny (N,fin)x(fin,fout)
    # matmul left to XLA in the wrapper; the kernel then streams adj only once.
    xw = jnp.dot(x, weight, preferred_element_type=jnp.float32).astype(out_dtype)
    xcat = jnp.concatenate([x, xw], axis=1)          # (N, fin + fout)
    fcat = fin + fout
    fcat_p = _round_up(fcat, 128)                    # lane-dense output width

    # Clamp tiles to the (aligned) problem size, then pad arrays to multiples.
    tm = min(tm, _round_up(N, 8))
    tk = min(tk, _round_up(N, 128))
    n_rows = _round_up(N, tm)
    n_k = _round_up(N, tk)

    adj_p = jnp.zeros((n_rows, n_k), compute_dtype)
    adj_p = adj_p.at[:N, :N].set(adj.astype(compute_dtype))
    xcat_p = jnp.zeros((n_k, fcat_p), compute_dtype)
    xcat_p = xcat_p.at[:N, :fcat].set(xcat.astype(compute_dtype))

    grid = (n_rows // tm, n_k // tk)

    # Explicit VMEM budget: double-buffered inputs/output + accumulator, with
    # headroom, clamped so it stays safe on v7x's 64 MiB physical VMEM.
    cbytes = jnp.dtype(compute_dtype).itemsize
    obytes = jnp.dtype(out_dtype).itemsize
    vmem_need = (2 * (tm * tk + tk * fcat_p) * cbytes
                 + 2 * tm * fcat_p * obytes
                 + tm * fcat_p * 4)
    vmem_limit = int(min(max(4 * vmem_need, 16 * 1024 * 1024),
                         32 * 1024 * 1024))

    cost = pl.CostEstimate(
        flops=int(2 * n_rows * n_k * fcat_p + 2 * N * fin * fout),
        transcendentals=0,
        bytes_accessed=int(adj_p.size * cbytes + xcat_p.size * cbytes
                           + n_rows * fcat_p * obytes),
    )

    out_p = pl.pallas_call(
        _gcn_kernel,
        out_shape=jax.ShapeDtypeStruct((n_rows, fcat_p), out_dtype),
        grid_spec=pltpu.PrefetchScalarGridSpec(
            num_scalar_prefetch=0,
            grid=grid,
            in_specs=[
                pl.BlockSpec((tm, tk), lambda i, k: (i, k)),       # adj tile
                pl.BlockSpec((tk, fcat_p), lambda i, k: (k, 0)),   # [x|xw] tile
            ],
            out_specs=pl.BlockSpec((tm, fcat_p), lambda i, k: (i, 0)),
            scratch_shapes=[pltpu.VMEM((tm, fcat_p), jnp.float32)],
        ),
        compiler_params=pltpu.CompilerParams(
            dimension_semantics=("parallel", "arbitrary"),
            vmem_limit_bytes=vmem_limit,
        ),
        cost_estimate=cost,
    )(adj_p, xcat_p)

    m0 = out_p[:N, :fin]
    m = out_p[:N, fin:fcat]
    return m, m0


if __name__ == "__main__":
    # Small synthetic problem: N nodes, in/out feature sizes.
    N, in_size, out_size = 64, 32, 16
    key = jax.random.PRNGKey(0)
    k_x, k_adj, k_w = jax.random.split(key, 3)

    x = jax.random.normal(k_x, (N, in_size), dtype=jnp.float32)

    # Deterministic "normalized adjacency": random sparse-ish mask, row-normalized.
    raw = jax.random.uniform(k_adj, (N, N), dtype=jnp.float32)
    mask = (raw > 0.8).astype(jnp.float32) + jnp.eye(N, dtype=jnp.float32)
    adj = mask / jnp.sum(mask, axis=1, keepdims=True)

    # Parameter init matching reset_parameters: uniform(-stdv, stdv), stdv = 1/sqrt(out).
    stdv = 1.0 / math.sqrt(out_size)
    weight = jax.random.uniform(
        k_w, (in_size, out_size), dtype=jnp.float32, minval=-stdv, maxval=stdv
    )

    m, m0 = graph_convolution(x, adj, weight)
    jax.block_until_ready((m, m0))

    # Cross-check against plain f32 JAX reference (kernel streams bf16, so
    # compare with a tolerance appropriate for bf16 inputs / f32 accumulation).
    m0_ref = adj @ x
    m_ref = m0_ref @ weight
    assert m.shape == (N, out_size) and m0.shape == (N, in_size)
    assert jnp.allclose(m0, m0_ref, atol=3e-2, rtol=3e-2)
    assert jnp.allclose(m, m_ref, atol=3e-2, rtol=3e-2)

    print("KERNEL_OK")
</pallas_src>

<mosaic_0001>
module attributes {stable_mosaic.version = 11 : i64} {
  func.func @_gcn_kernel(%arg0: i32, %arg1: i32, %arg2: memref<64x128xbf16, #tpu.memory_space<vmem>>, %arg3: memref<128x128xbf16, #tpu.memory_space<vmem>>, %arg4: memref<64x128xf32, #tpu.memory_space<vmem>>, %arg5: memref<64x128xf32, #tpu.memory_space<vmem>>) attributes {dimension_semantics = [#tpu.dimension_semantics<parallel>, #tpu.dimension_semantics<arbitrary>], iteration_bounds = array<i64: 1, 1>, scalar_prefetch = 0 : i64, scratch_operands = 1 : i64, tpu.core_type = #tpu.core_type<tc>, window_params = [{transform_indices = @transform_0, window_bounds = array<i64: 64, 128>}, {transform_indices = @transform_1, window_bounds = array<i64: 128, 128>}, {transform_indices = @transform_2, window_bounds = array<i64: 64, 128>}]} {
    %c0_i32 = arith.constant 0 : i32
    %0 = arith.cmpi eq, %arg1, %c0_i32 : i32
    %1 = arith.extui %0 : i1 to i32
    %c0_i32_0 = arith.constant 0 : i32
    %2 = arith.cmpi ne, %1, %c0_i32_0 : i32
    scf.if %2 {
      %cst_10 = arith.constant 0.000000e+00 : f32
      %12 = vector.broadcast %cst_10 : f32 to vector<64x128xf32>
      %c0_11 = arith.constant 0 : index
      %c0_12 = arith.constant 0 : index
      %13 = vector.load %arg5[%c0_11, %c0_12] : memref<64x128xf32, #tpu.memory_space<vmem>>, vector<64x128xf32>
      tpu.vector_store %arg5[%c0_11, %c0_12], %12 {strides = array<i32>} : memref<64x128xf32, #tpu.memory_space<vmem>>, vector<64x128xf32>,
    } else {
    }
    %c0 = arith.constant 0 : index
    %c0_1 = arith.constant 0 : index
    %3 = vector.load %arg5[%c0, %c0_1] : memref<64x128xf32, #tpu.memory_space<vmem>>, vector<64x128xf32>
    %c0_2 = arith.constant 0 : index
    %c0_3 = arith.constant 0 : index
    %4 = vector.load %arg2[%c0_2, %c0_3] : memref<64x128xbf16, #tpu.memory_space<vmem>>, vector<64x128xbf16>
    %c0_4 = arith.constant 0 : index
    %c0_5 = arith.constant 0 : index
    %5 = vector.load %arg3[%c0_4, %c0_5] : memref<128x128xbf16, #tpu.memory_space<vmem>>, vector<128x128xbf16>
    %cst = arith.constant dense<0.000000e+00> : vector<64x128xf32>
    %6 = tpu.matmul %4, %5, %cst {dimension_numbers = #tpu.dot_dimension_numbers<[1], [0], [0], [1], [0, 0, 1, 1], [], []>} : vector<64x128xbf16>, vector<128x128xbf16>, vector<64x128xf32> -> vector<64x128xf32>
    %7 = arith.addf %3, %6 : vector<64x128xf32>
    %c0_6 = arith.constant 0 : index
    %c0_7 = arith.constant 0 : index
    %8 = vector.load %arg5[%c0_6, %c0_7] : memref<64x128xf32, #tpu.memory_space<vmem>>, vector<64x128xf32>
    tpu.vector_store %arg5[%c0_6, %c0_7], %7 {strides = array<i32>} : memref<64x128xf32, #tpu.memory_space<vmem>>, vector<64x128xf32>,
    %c0_i32_8 = arith.constant 0 : i32
    %9 = arith.cmpi eq, %arg1, %c0_i32_8 : i32
    %10 = arith.extui %9 : i1 to i32
    %c0_i32_9 = arith.constant 0 : i32
    %11 = arith.cmpi ne, %10, %c0_i32_9 : i32
    scf.if %11 {
      %c0_10 = arith.constant 0 : index
      %c0_11 = arith.constant 0 : index
      %12 = vector.load %arg5[%c0_10, %c0_11] : memref<64x128xf32, #tpu.memory_space<vmem>>, vector<64x128xf32>
      %c0_12 = arith.constant 0 : index
      %c0_13 = arith.constant 0 : index
      %13 = vector.load %arg4[%c0_12, %c0_13] : memref<64x128xf32, #tpu.memory_space<vmem>>, vector<64x128xf32>
      tpu.vector_store %arg4[%c0_12, %c0_13], %12 {strides = array<i32>} : memref<64x128xf32, #tpu.memory_space<vmem>>, vector<64x128xf32>,
    } else {
    }
    return
  }
  func.func @transform_0(%arg0: i32, %arg1: i32) -> (i32, i32) {
    %c0_i32 = arith.constant 0 : i32
    return %arg0, %arg1 : i32, i32
  }
  func.func @transform_1(%arg0: i32, %arg1: i32) -> (i32, i32) {
    %c0_i32 = arith.constant 0 : i32
    %c0_i32_0 = arith.constant 0 : i32
    return %arg1, %c0_i32 : i32, i32
  }
  func.func @transform_2(%arg0: i32, %arg1: i32) -> (i32, i32) {
    %c0_i32 = arith.constant 0 : i32
    %c0_i32_0 = arith.constant 0 : i32
    return %arg0, %c0_i32 : i32, i32
  }
}

</mosaic_0001>

<llo_original>
// kernel: tpu_custom_call.1
$region0: #{tpu_custom_call.1}
  #allocation0 [shape = 'u32[]', space=smem, size = 0x4, offset = 0x4, fixed_abs, tag = 'smem constant byte address 0x4 - core index']
  #allocation1 [shape = 'u32[144,128]{1,0:T(1,128)}', space=vmem, size = 0x12000, scoped, tag = 'internal scratch']
  #allocation2 [shape = 'f32[64,128]{1,0:T(8,128)}', space=vmem, size = 0x8000, scoped, tag = 'scratch operand']
  %s0 = inlined_call_operand.hbm [shape: bf16[64,128], index: 0, kind: input, shape index: {}]
  %s1 = inlined_call_operand.hbm [shape: bf16[128,128], index: 1, kind: input, shape index: {}]
  %s2 = inlined_call_operand.hbm [shape: f32[64,128], index: 2, kind: output, shape index: {}]
  %s3 = sld [smem:[#allocation0]]
  $region34: #{tpu_custom_call.1} parent=0
    _
  %s5 = ssub.s32 1, %s3
  %s6 = scalar_select 0, %s5, %s3
  $region1: #{tpu_custom_call.1} parent=0
    #allocation3 [shape = 'u8[16384]{0}', space=vmem, size = 0x4000, scoped, tag = 'input window, operand 0, single buffered']
    #allocation4 [shape = 's32[1]{0}', space=sflag, size = 0x4, scoped, tag = 'scoped memory for tpu_custom_call.1']
    #allocation5 [shape = 's32[1]{0}', space=sflag, size = 0x4, scoped, tag = 'scoped memory for tpu_custom_call.1']
    #allocation6 [shape = 'u8[32768]{0}', space=vmem, size = 0x8000, scoped, tag = 'input window, operand 1, single buffered']
    #allocation7 [shape = 's32[1]{0}', space=sflag, size = 0x4, scoped, tag = 'scoped memory for tpu_custom_call.1']
    #allocation8 [shape = 'u8[32768]{0}', space=vmem, size = 0x8000, scoped, tag = 'output window, operand 0, single buffered']
    %7 = vsyncpa [#allocation4], 0
    %8 = vsyncpa [#allocation7], 0
    %9 = vsyncpa [#allocation5], 0
    // Predicated region
    $region2: #{tpu_custom_call.1} parent=1 // pred_check
      _
    $region3: #{tpu_custom_call.1} parent=1 // pred_check_branch
      %11 = sbr.rel (0) target = $region5
    $region4: #{tpu_custom_call.1} parent=1 // pred_region
      %s13 = ssub.s32 512, 512
      %14 = vsyncadd [#allocation4], %s13
      %s15 = sshll.u32 [#allocation3], 4
      %s16 = int_to_ptr.vmem [resolvable:$true] %s15
      %21 = dma.hbm_to_vmem [thread:$0]  %s0, 512, %s16, [#allocation4], 64, 64, 4
    $region5: #{tpu_custom_call.1} parent=1 // pred_fallthru
      _
    // Predicated region
    $region6: #{tpu_custom_call.1} parent=1 // pred_check
      _
    $region7: #{tpu_custom_call.1} parent=1 // pred_check_branch
      %23 = sbr.rel (0) target = $region9
    $region8: #{tpu_custom_call.1} parent=1 // pred_region
      %s25 = ssub.s32 1024, 1024
      %26 = vsyncadd [#allocation7], %s25
      %s27 = sshll.u32 [#allocation6], 4
      %s28 = int_to_ptr.vmem [resolvable:$true] %s27
      %33 = dma.hbm_to_vmem [thread:$0]  %s1, 1024, %s28, [#allocation7], 64, 64, 4
    $region9: #{tpu_custom_call.1} parent=1 // pred_fallthru
      _
    // Predicated region
    $region10: #{tpu_custom_call.1} parent=1 // pred_check
      _
    $region11: #{tpu_custom_call.1} parent=1 // pred_check_branch
      %35 = sbr.rel (0) target = $region13
    $region12: #{tpu_custom_call.1} parent=1 // pred_region
      %36 = dma.done [#allocation4], 512
    $region13: #{tpu_custom_call.1} parent=1 // pred_fallthru
      _
    // Predicated region
    $region14: #{tpu_custom_call.1} parent=1 // pred_check
      _
    $region15: #{tpu_custom_call.1} parent=1 // pred_check_branch
      %38 = sbr.rel (0) target = $region17
    $region16: #{tpu_custom_call.1} parent=1 // pred_region
      %39 = dma.done [#allocation7], 1024
    $region17: #{tpu_custom_call.1} parent=1 // pred_fallthru
      _
    %p41 = scmp.eq.s32.totalorder 0, 0
    // Predicated region
    $region18: #{tpu_custom_call.1} parent=1 // pred_check
      %p42 = pneg %p41
    $region19: #{tpu_custom_call.1} parent=1 // pred_check_branch
      %44 = sbr.rel (%p42) target = $region21
    $region20: #{tpu_custom_call.1} parent=1 // pred_region
      %45 = vst [vmem:[#allocation2] sm:$0xff] 0.0
      %46 = vst [vmem:[#allocation2 + $0x8] sm:$0xff] 0.0
      %47 = vst [vmem:[#allocation2 + $0x10] sm:$0xff] 0.0
      %48 = vst [vmem:[#allocation2 + $0x18] sm:$0xff] 0.0
      %49 = vst [vmem:[#allocation2 + $0x20] sm:$0xff] 0.0
      %50 = vst [vmem:[#allocation2 + $0x28] sm:$0xff] 0.0
      %51 = vst [vmem:[#allocation2 + $0x30] sm:$0xff] 0.0
      %52 = vst [vmem:[#allocation2 + $0x38] sm:$0xff] 0.0
    $region21: #{tpu_custom_call.1} parent=1 // pred_fallthru
      _
    %v53 = vld [vmem:[#allocation2] sm:$0xff]
    %v54 = vld [vmem:[#allocation2 + $0x8] sm:$0xff]
    %v55 = vld [vmem:[#allocation2 + $0x10] sm:$0xff]
    %v56 = vld [vmem:[#allocation2 + $0x18] sm:$0xff]
    %v57 = vld [vmem:[#allocation2 + $0x20] sm:$0xff]
    %v58 = vld [vmem:[#allocation2 + $0x28] sm:$0xff]
    %v59 = vld [vmem:[#allocation2 + $0x30] sm:$0xff]
    %v60 = vld [vmem:[#allocation2 + $0x38] sm:$0xff]
    %v61 = vld [vmem:[#allocation3] sm:$0xf]
    %v62 = vld [vmem:[#allocation3 + $0x4] sm:$0xf]
    %v63 = vld [vmem:[#allocation3 + $0x8] sm:$0xf]
    %v64 = vld [vmem:[#allocation3 + $0xc] sm:$0xf]
    %v65 = vld [vmem:[#allocation3 + $0x10] sm:$0xf]
    %v66 = vld [vmem:[#allocation3 + $0x14] sm:$0xf]
    %v67 = vld [vmem:[#allocation3 + $0x18] sm:$0xf]
    %v68 = vld [vmem:[#allocation3 + $0x1c] sm:$0xf]
    %v69 = vld [vmem:[#allocation6] sm:$0xf]
    %v70 = vld [vmem:[#allocation6 + $0x4] sm:$0xf]
    %v71 = vld [vmem:[#allocation6 + $0x8] sm:$0xf]
    %v72 = vld [vmem:[#allocation6 + $0xc] sm:$0xf]
    %v73 = vld [vmem:[#allocation6 + $0x10] sm:$0xf]
    %v74 = vld [vmem:[#allocation6 + $0x14] sm:$0xf]
    %v75 = vld [vmem:[#allocation6 + $0x18] sm:$0xf]
    %v76 = vld [vmem:[#allocation6 + $0x1c] sm:$0xf]
    %v77 = vld [vmem:[#allocation6 + $0x20] sm:$0xf]
    %v78 = vld [vmem:[#allocation6 + $0x24] sm:$0xf]
    %v79 = vld [vmem:[#allocation6 + $0x28] sm:$0xf]
    %v80 = vld [vmem:[#allocation6 + $0x2c] sm:$0xf]
    %v81 = vld [vmem:[#allocation6 + $0x30] sm:$0xf]
    %v82 = vld [vmem:[#allocation6 + $0x34] sm:$0xf]
    %v83 = vld [vmem:[#allocation6 + $0x38] sm:$0xf]
    %v84 = vld [vmem:[#allocation6 + $0x3c] sm:$0xf]
    %v93 = vunpack.c.l.b16 %v61
    %v94 = vunpack.c.l.b16 %v62
    %v95 = vunpack.c.l.b16 %v63
    %v96 = vunpack.c.l.b16 %v64
    %v97 = vunpack.c.l.b16 %v65
    %v98 = vunpack.c.l.b16 %v66
    %v99 = vunpack.c.l.b16 %v67
    %v100 = vunpack.c.l.b16 %v68
    %v101 = vpack.c.b16 %v94, %v93
    %v102 = vpack.c.b16 %v96, %v95
    %v103 = vpack.c.b16 %v98, %v97
    %v104 = vpack.c.b16 %v100, %v99
    %v125 = vunpack.c.l.b16 %v69
    %v126 = vunpack.c.l.b16 %v70
    %v127 = vunpack.c.l.b16 %v71
    %v128 = vunpack.c.l.b16 %v72
    %v129 = vunpack.c.l.b16 %v73
    %v130 = vunpack.c.l.b16 %v74
    %v131 = vunpack.c.l.b16 %v75
    %v132 = vunpack.c.l.b16 %v76
    %v133 = vunpack.c.l.b16 %v77
    %v134 = vunpack.c.l.b16 %v78
    %v135 = vunpack.c.l.b16 %v79
    %v136 = vunpack.c.l.b16 %v80
    %v137 = vunpack.c.l.b16 %v81
    %v138 = vunpack.c.l.b16 %v82
    %v139 = vunpack.c.l.b16 %v83
    %v140 = vunpack.c.l.b16 %v84
    %v141 = vpack.c.b16 %v126, %v125
    %v142 = vpack.c.b16 %v128, %v127
    %v143 = vpack.c.b16 %v130, %v129
    %v144 = vpack.c.b16 %v132, %v131
    %v145 = vpack.c.b16 %v134, %v133
    %v146 = vpack.c.b16 %v136, %v135
    %v147 = vpack.c.b16 %v138, %v137
    %v148 = vpack.c.b16 %v140, %v139
    %157 = vmatprep.subr.bf16.mxu0 0
    %158 = vmatpush1.bf16.msra.mxu0 %v148
    %159 = vmatprep.subr.bf16.mxu0 0
    %160 = vmatpush1.bf16.msra.mxu0 %v147
    %161 = vmatprep.subr.bf16.mxu0 0
    %162 = vmatpush1.bf16.msra.mxu0 %v146
    %163 = vmatprep.subr.bf16.mxu0 0
    %164 = vmatpush1.bf16.msra.mxu0 %v145
    %165 = vmatprep.subr.bf16.mxu0 0
    %166 = vmatpush1.bf16.msra.mxu0 %v144
    %167 = vmatprep.subr.bf16.mxu0 0
    %168 = vmatpush1.bf16.msra.mxu0 %v143
    %169 = vmatprep.subr.bf16.mxu0 0
    %170 = vmatpush1.bf16.msra.mxu0 %v142
    %171 = vmatprep.subr.bf16.mxu0 0
    %172 = vmatpush1.bf16.msra.mxu0 %v141
    %173 = vmatprep.subr.bf16.mxu0 0
    %174 = vmatpush2.bf16.msra.mxu0 0
    %175 = vmatprep.subr.bf16.mxu0 0
    %176 = vmatpush2.bf16.msra.mxu0 0
    %177 = vmatprep.subr.bf16.mxu0 0
    %178 = vmatpush2.bf16.msra.mxu0 0
    %179 = vmatprep.subr.bf16.mxu0 0
    %180 = vmatpush2.bf16.msra.mxu0 0
    %181 = vmatprep.subr.bf16.mxu0 0
    %182 = vmatpush2.bf16.msra.mxu0 0
    %183 = vmatprep.subr.bf16.mxu0 0
    %184 = vmatpush2.bf16.msra.mxu0 0
    %185 = vmatprep.subr.bf16.mxu0 0
    %186 = vmatpush2.bf16.msra.mxu0 0
    %187 = vmatprep.subr.bf16.mxu0 0
    %188 = vmatpush2.bf16.msra.mxu0 0
    %189 = vmatprep.mubr.bf16.mxu0 0
    %190 = vmatmul.mubr.bf16.gmra.mxu0 %v101
    %v191 = vpop.f32.mrf.mxu0
    %v192 = vadd.f32 0.0, %v191
    %v193 = vpop.f32.mrf.mxu0
    %v194 = vpop.f32.mrf.mxu0
    %v195 = vadd.f32 0.0, %v194
    %v196 = vpop.f32.mrf.mxu0
    %197 = vmatprep.mubr.bf16.mxu0 0
    %198 = vmatmul.mubr.bf16.gmra.mxu0 %v102
    %v199 = vpop.f32.mrf.mxu0
    %v200 = vadd.f32 0.0, %v199
    %v201 = vpop.f32.mrf.mxu0
    %v202 = vpop.f32.mrf.mxu0
    %v203 = vadd.f32 0.0, %v202
    %v204 = vpop.f32.mrf.mxu0
    %205 = vmatprep.mubr.bf16.mxu0 0
    %206 = vmatmul.mubr.bf16.gmra.mxu0 %v103
    %v207 = vpop.f32.mrf.mxu0
    %v208 = vadd.f32 0.0, %v207
    %v209 = vpop.f32.mrf.mxu0
    %v210 = vpop.f32.mrf.mxu0
    %v211 = vadd.f32 0.0, %v210
    %v212 = vpop.f32.mrf.mxu0
    %213 = vmatprep.mubr.bf16.mxu0 0
    %214 = vmatmul.mubr.bf16.gmra.mxu0 %v104
    %v215 = vpop.f32.mrf.mxu0
    %v216 = vadd.f32 0.0, %v215
    %v217 = vpop.f32.mrf.mxu0
    %v218 = vpop.f32.mrf.mxu0
    %v219 = vadd.f32 0.0, %v218
    %v220 = vpop.f32.mrf.mxu0
    %221 = vdwg.mxu0
    %v222 = vadd.f32 %v53, %v192
    %v223 = vadd.f32 %v54, %v195
    %v224 = vadd.f32 %v55, %v200
    %v225 = vadd.f32 %v56, %v203
    %v226 = vadd.f32 %v57, %v208
    %v227 = vadd.f32 %v58, %v211
    %v228 = vadd.f32 %v59, %v216
    %v229 = vadd.f32 %v60, %v219
    %230 = vst [vmem:[#allocation2] sm:$0xff] %v222
    %231 = vst [vmem:[#allocation2 + $0x8] sm:$0xff] %v223
    %232 = vst [vmem:[#allocation2 + $0x10] sm:$0xff] %v224
    %233 = vst [vmem:[#allocation2 + $0x18] sm:$0xff] %v225
    %234 = vst [vmem:[#allocation2 + $0x20] sm:$0xff] %v226
    %235 = vst [vmem:[#allocation2 + $0x28] sm:$0xff] %v227
    %236 = vst [vmem:[#allocation2 + $0x30] sm:$0xff] %v228
    %237 = vst [vmem:[#allocation2 + $0x38] sm:$0xff] %v229
    // Predicated region
    $region22: #{tpu_custom_call.1} parent=1 // pred_check
      %p238 = pneg %p41
    $region23: #{tpu_custom_call.1} parent=1 // pred_check_branch
      %240 = sbr.rel (%p238) target = $region25
    $region24: #{tpu_custom_call.1} parent=1 // pred_region
      %v241 = vld [vmem:[#allocation2] sm:$0xff]
      %v242 = vld [vmem:[#allocation2 + $0x8] sm:$0xff]
      %v243 = vld [vmem:[#allocation2 + $0x10] sm:$0xff]
      %v244 = vld [vmem:[#allocation2 + $0x18] sm:$0xff]
      %v245 = vld [vmem:[#allocation2 + $0x20] sm:$0xff]
      %v246 = vld [vmem:[#allocation2 + $0x28] sm:$0xff]
      %v247 = vld [vmem:[#allocation2 + $0x30] sm:$0xff]
      %v248 = vld [vmem:[#allocation2 + $0x38] sm:$0xff]
      %249 = vst [vmem:[#allocation8] sm:$0xff] %v241
      %250 = vst [vmem:[#allocation8 + $0x8] sm:$0xff] %v242
      %251 = vst [vmem:[#allocation8 + $0x10] sm:$0xff] %v243
      %252 = vst [vmem:[#allocation8 + $0x18] sm:$0xff] %v244
      %253 = vst [vmem:[#allocation8 + $0x20] sm:$0xff] %v245
      %254 = vst [vmem:[#allocation8 + $0x28] sm:$0xff] %v246
      %255 = vst [vmem:[#allocation8 + $0x30] sm:$0xff] %v247
      %256 = vst [vmem:[#allocation8 + $0x38] sm:$0xff] %v248
    $region25: #{tpu_custom_call.1} parent=1 // pred_fallthru
      _
    // Predicated region
    $region26: #{tpu_custom_call.1} parent=1 // pred_check
      _
    $region27: #{tpu_custom_call.1} parent=1 // pred_check_branch
      %258 = sbr.rel (0) target = $region29
    $region28: #{tpu_custom_call.1} parent=1 // pred_region
      %s260 = ssub.s32 1024, 1024
      %261 = vsyncadd [#allocation5], %s260
      %s262 = sshll.u32 [#allocation8], 4
      %s263 = int_to_ptr.vmem [resolvable:$true] %s262
      %268 = dma.vmem_to_hbm [thread:$0]  %s263, 1024, %s2, [#allocation5], 128, 128, 8
    $region29: #{tpu_custom_call.1} parent=1 // pred_fallthru
      _
    // Predicated region
    $region30: #{tpu_custom_call.1} parent=1 // pred_check
      _
    $region31: #{tpu_custom_call.1} parent=1 // pred_check_branch
      %270 = sbr.rel (0) target = $region33
    $region32: #{tpu_custom_call.1} parent=1 // pred_region
      %271 = dma.done [#allocation5], 1024
    $region33: #{tpu_custom_call.1} parent=1 // pred_fallthru
      _
    %272 = vsyncpa [#allocation4], 1
    %273 = vsyncpa [#allocation7], 1
    %274 = vsyncpa [#allocation5], 1

</llo_original>
